<compile_context>
chip_gen: v7x
topology: tpu7x:2x2x1
jax: 0.10.0
libtpu: 0.0.40
codegen_flags: <defaults>
</compile_context>

<pallas_src>
import jax
import jax.numpy as jnp
from jax.experimental import pallas as pl
from jax.experimental.pallas import tpu as pltpu


_LANE = 512          # last-dim width: multiple of 128 -> unmasked lane-dense stores
_TILE_ROWS = 1024    # rows per block: multiple of 8; 1024*512*4B = 2 MiB f32 tile


def _residual_add_kernel(x_ref, out_ref):
    # blocks(x) == x and shortcut(x) == x, so x + residual == x + x.
    x = x_ref[...]
    out_ref[...] = x + x


def residual_block_forward(x, in_channels, out_channels):
    """Pallas implementation of ResidualBlock.forward for NCHW input."""
    assert x.shape[1] == in_channels, "channel dim mismatch with in_channels"
    # `should_apply_shortcut` only switches to nn.Identity(), so the residual is x
    # regardless of in_channels == out_channels.
    del out_channels

    n, c, h, w = x.shape
    total = n * c * h * w

    # Flatten everything and pad up to a lane-dense, tile-aligned 2-D slab (M, LANE).
    m_rows = pl.cdiv(total, _LANE)
    if m_rows <= _TILE_ROWS:
        tile_m = m_rows            # full-extent block: exempt from the 8-row rule
        m_pad = m_rows
    else:
        tile_m = _TILE_ROWS
        m_pad = pl.cdiv(m_rows, tile_m) * tile_m

    padded_total = m_pad * _LANE
    flat = x.reshape(-1)
    if padded_total != total:
        flat = jnp.pad(flat, (0, padded_total - total))
    x2d = flat.reshape(m_pad, _LANE)

    grid = (m_pad // tile_m,)

    out2d = pl.pallas_call(
        _residual_add_kernel,
        out_shape=jax.ShapeDtypeStruct(x2d.shape, x2d.dtype),
        grid=grid,
        in_specs=[pl.BlockSpec((tile_m, _LANE), lambda i: (i, 0))],
        out_specs=pl.BlockSpec((tile_m, _LANE), lambda i: (i, 0)),
        compiler_params=pltpu.CompilerParams(
            dimension_semantics=("parallel",),  # shards across v7x's 2 TCs
        ),
    )(x2d)

    out_flat = out2d.reshape(-1)
    if padded_total != total:
        out_flat = out_flat[:total]
    out = out_flat.reshape(n, c, h, w)
    # activation is None in the reference __init__ -> identity passthrough.
    return out


if __name__ == "__main__":
    key = jax.random.PRNGKey(0)
    N, C, H, W = 2, 4, 16, 16  # small NCHW input, in_channels == out_channels
    x = jax.random.normal(key, (N, C, H, W), dtype=jnp.float32)

    out = residual_block_forward(x, in_channels=C, out_channels=C)
    out = jax.block_until_ready(out)

    # Reference: Identity blocks + Identity shortcut + in-place add -> 2 * x
    ref = x + x
    assert out.shape == x.shape and out.dtype == x.dtype
    assert jnp.allclose(out, ref, atol=1e-6, rtol=1e-6)

    print("KERNEL_OK")
</pallas_src>

<mosaic_0001>
module attributes {stable_mosaic.version = 11 : i64} {
  func.func @_residual_add_kernel(%arg0: i32, %arg1: memref<4x512xf32, #tpu.memory_space<vmem>>, %arg2: memref<4x512xf32, #tpu.memory_space<vmem>>) attributes {dimension_semantics = [#tpu.dimension_semantics<parallel>], iteration_bounds = array<i64: 1>, scalar_prefetch = 0 : i64, scratch_operands = 0 : i64, tpu.core_type = #tpu.core_type<tc>, window_params = [{transform_indices = @transform_0, window_bounds = array<i64: 4, 512>}, {transform_indices = @transform_1, window_bounds = array<i64: 4, 512>}]} {
    %c0 = arith.constant 0 : index
    %c0_0 = arith.constant 0 : index
    %0 = vector.load %arg1[%c0, %c0_0] : memref<4x512xf32, #tpu.memory_space<vmem>>, vector<4x512xf32>
    %1 = arith.addf %0, %0 : vector<4x512xf32>
    %c0_1 = arith.constant 0 : index
    %c0_2 = arith.constant 0 : index
    %2 = vector.load %arg2[%c0_1, %c0_2] : memref<4x512xf32, #tpu.memory_space<vmem>>, vector<4x512xf32>
    tpu.vector_store %arg2[%c0_1, %c0_2], %1 {strides = array<i32>} : memref<4x512xf32, #tpu.memory_space<vmem>>, vector<4x512xf32>,
    return
  }
  func.func @transform_0(%arg0: i32) -> (i32, i32) {
    %c0_i32 = arith.constant 0 : i32
    %c0_i32_0 = arith.constant 0 : i32
    return %arg0, %c0_i32 : i32, i32
  }
  func.func @transform_1(%arg0: i32) -> (i32, i32) {
    %c0_i32 = arith.constant 0 : i32
    %c0_i32_0 = arith.constant 0 : i32
    return %arg0, %c0_i32 : i32, i32
  }
}

</mosaic_0001>

<llo_original>
// kernel: tpu_custom_call.1
$region0: #{tpu_custom_call.1}
  #allocation0 [shape = 'u32[]', space=smem, size = 0x4, offset = 0x4, fixed_abs, tag = 'smem constant byte address 0x4 - core index']
  #allocation1 [shape = 'u32[144,128]{1,0:T(1,128)}', space=vmem, size = 0x12000, scoped, tag = 'internal scratch']
  %s0 = inlined_call_operand.hbm [shape: f32[4,512], index: 0, kind: input, shape index: {}]
  %s1 = inlined_call_operand.hbm [shape: f32[4,512], index: 1, kind: output, shape index: {}]
  %s2 = sld [smem:[#allocation0]]
  $region18: #{tpu_custom_call.1} parent=0
    _
  %s4 = ssub.s32 1, %s2
  %s5 = scalar_select 0, %s4, %s2
  $region1: #{tpu_custom_call.1} parent=0
    #allocation2 [shape = 'u8[8192]{0}', space=vmem, size = 0x2000, scoped, tag = 'input window, operand 0, single buffered']
    #allocation3 [shape = 's32[1]{0}', space=sflag, size = 0x4, scoped, tag = 'scoped memory for tpu_custom_call.1']
    #allocation4 [shape = 's32[1]{0}', space=sflag, size = 0x4, scoped, tag = 'scoped memory for tpu_custom_call.1']
    #allocation5 [shape = 'u8[8192]{0}', space=vmem, size = 0x2000, scoped, tag = 'output window, operand 0, single buffered']
    %6 = vsyncpa [#allocation3], 0
    %7 = vsyncpa [#allocation4], 0
    // Predicated region
    $region2: #{tpu_custom_call.1} parent=1 // pred_check
      _
    $region3: #{tpu_custom_call.1} parent=1 // pred_check_branch
      %9 = sbr.rel (0) target = $region5
    $region4: #{tpu_custom_call.1} parent=1 // pred_region
      %s11 = ssub.s32 256, 256
      %12 = vsyncadd [#allocation3], %s11
      %s14 = sshll.u32 [#allocation2], 4
      %s15 = int_to_ptr.vmem [resolvable:$true] %s14
      %17 = dma.hbm_to_vmem [thread:$0]  %s0, 256, %s15, [#allocation3]
    $region5: #{tpu_custom_call.1} parent=1 // pred_fallthru
      _
    // Predicated region
    $region6: #{tpu_custom_call.1} parent=1 // pred_check
      _
    $region7: #{tpu_custom_call.1} parent=1 // pred_check_branch
      %19 = sbr.rel (0) target = $region9
    $region8: #{tpu_custom_call.1} parent=1 // pred_region
      %20 = dma.done [#allocation3], 256
    $region9: #{tpu_custom_call.1} parent=1 // pred_fallthru
      _
    %v21 = vld [vmem:[#allocation2] sm:$0xff]
    %v22 = vld [vmem:[#allocation2 + $0x8] sm:$0xff]
    %v23 = vadd.f32 %v21, %v21
    %v24 = vadd.f32 %v22, %v22
    %25 = vst [vmem:[#allocation5] sm:$0xff] %v23
    %26 = vst [vmem:[#allocation5 + $0x8] sm:$0xff] %v24
    // Predicated region
    $region10: #{tpu_custom_call.1} parent=1 // pred_check
      _
    $region11: #{tpu_custom_call.1} parent=1 // pred_check_branch
      %28 = sbr.rel (0) target = $region13
    $region12: #{tpu_custom_call.1} parent=1 // pred_region
      %s30 = ssub.s32 256, 256
      %31 = vsyncadd [#allocation4], %s30
      %s33 = sshll.u32 [#allocation5], 4
      %s34 = int_to_ptr.vmem [resolvable:$true] %s33
      %36 = dma.vmem_to_hbm [thread:$0]  %s34, 256, %s1, [#allocation4]
    $region13: #{tpu_custom_call.1} parent=1 // pred_fallthru
      _
    // Predicated region
    $region14: #{tpu_custom_call.1} parent=1 // pred_check
      _
    $region15: #{tpu_custom_call.1} parent=1 // pred_check_branch
      %38 = sbr.rel (0) target = $region17
    $region16: #{tpu_custom_call.1} parent=1 // pred_region
      %39 = dma.done [#allocation4], 256
    $region17: #{tpu_custom_call.1} parent=1 // pred_fallthru
      _
    %40 = vsyncpa [#allocation3], 1
    %41 = vsyncpa [#allocation4], 1

</llo_original>
